<compile_context>
chip_gen: v7x
topology: tpu7x:2x2x1
jax: 0.10.0
libtpu: 0.0.40
codegen_flags: <defaults>
</compile_context>

<pallas_src>
import functools

import jax
import jax.numpy as jnp
from jax.experimental import pallas as pl
from jax.experimental.pallas import tpu as pltpu

EPS = 1e-8


def _kcl_partial_kernel(p_ref, t_ref, o_ref, *, tile_rows, n_rows, mask_tail):
    p = p_ref[...].astype(jnp.float32)
    t = t_ref[...].astype(jnp.float32)
    # Single EUP log per element instead of two.
    val = t * jnp.log((t + EPS) / (p + EPS))
    if mask_tail:
        row = pl.program_id(0) * tile_rows + jax.lax.broadcasted_iota(
            jnp.int32, val.shape, 0
        )
        val = jnp.where(row < n_rows, val, 0.0)
    # Fold rows 8-way with elementwise VPU adds (reshape of the leading dim is
    # layout-free); the expensive cross-lane reduction is deferred to a tiny
    # JAX epilogue, keeping it off the per-tile critical path.
    c = val.shape[1]
    o_ref[...] = val.reshape(tile_rows // 8, 8, c).sum(axis=0)


def _round_up(x, m):
    return (x + m - 1) // m * m


def kcl(prob1: jax.Array, prob2: jax.Array, *, tile_rows: int | None = None) -> jax.Array:
    """Pallas implementation of KCL().forward(prob1, prob2) -> scalar."""
    assert prob1.ndim == 2 and prob1.shape == prob2.shape, "Input dimension must be 2"
    n, c = prob1.shape

    if tile_rows is None:
        # ~2 MiB per input block: 2 inputs x 2 pipeline buffers ~= 8 MiB, which
        # fits v5e's 16 MiB default scoped VMEM and v7x's 32 MiB with headroom.
        target_bytes = 2 * 1024 * 1024
        tile_rows = max(8, min(1024, target_bytes // (c * 4)))
    tile_rows = min(tile_rows, _round_up(n, 8))
    tile_rows = max(8, (tile_rows // 8) * 8)

    num_tiles = pl.cdiv(n, tile_rows)
    mask_tail = (n % tile_rows) != 0

    kernel = functools.partial(
        _kcl_partial_kernel, tile_rows=tile_rows, n_rows=n, mask_tail=mask_tail
    )

    partials = pl.pallas_call(
        kernel,
        out_shape=jax.ShapeDtypeStruct((num_tiles * 8, c), jnp.float32),
        grid_spec=pltpu.PrefetchScalarGridSpec(
            num_scalar_prefetch=0,
            grid=(num_tiles,),
            in_specs=[
                pl.BlockSpec((tile_rows, c), lambda i: (i, 0)),  # prob1 (predict)
                pl.BlockSpec((tile_rows, c), lambda i: (i, 0)),  # prob2 (target)
            ],
            out_specs=pl.BlockSpec((8, c), lambda i: (i, 0)),
        ),
        compiler_params=pltpu.CompilerParams(
            # Independent per-tile partials -> both TensorCores contribute on v7x.
            dimension_semantics=("parallel",),
        ),
    )(prob1, prob2)

    # Tiny epilogue in plain JAX: sum of partials / batch == mean of per-row KLDs.
    return jnp.sum(partials) / jnp.float32(n)


def kcl_reference(prob1, prob2):
    p1 = prob1.astype(jnp.float32) + EPS
    t1 = prob2.astype(jnp.float32) + EPS
    kld = jnp.sum(prob2.astype(jnp.float32) * (jnp.log(t1) - jnp.log(p1)), axis=1)
    return jnp.mean(kld)


if __name__ == "__main__":
    key = jax.random.PRNGKey(0)
    k1, k2 = jax.random.split(key)

    batch, classes = 16, 128
    # Probability-like inputs (softmax over logits), as the module expects.
    prob1 = jax.nn.softmax(jax.random.normal(k1, (batch, classes), jnp.float32), axis=-1)
    prob2 = jax.nn.softmax(jax.random.normal(k2, (batch, classes), jnp.float32), axis=-1)

    out = kcl(prob1, prob2)
    jax.block_until_ready(out)

    ref = kcl_reference(prob1, prob2)
    assert jnp.allclose(out, ref, atol=1e-5, rtol=1e-5), (out, ref)

    # Also exercise a non-divisible batch spread over multiple tiles (tail mask).
    b2 = 100
    p1b = jax.nn.softmax(jax.random.normal(k1, (b2, classes), jnp.float32), axis=-1)
    p2b = jax.nn.softmax(jax.random.normal(k2, (b2, classes), jnp.float32), axis=-1)
    out2 = kcl(p1b, p2b, tile_rows=32)
    jax.block_until_ready(out2)
    ref2 = kcl_reference(p1b, p2b)
    assert jnp.allclose(out2, ref2, atol=1e-5, rtol=1e-5), (out2, ref2)

    print("KERNEL_OK")
</pallas_src>

<mosaic_0001>
module attributes {stable_mosaic.version = 11 : i64} {
  func.func @_kcl_partial_kernel(%arg0: i32, %arg1: memref<16x128xf32, #tpu.memory_space<vmem>>, %arg2: memref<16x128xf32, #tpu.memory_space<vmem>>, %arg3: memref<8x128xf32, #tpu.memory_space<vmem>>) attributes {dimension_semantics = [#tpu.dimension_semantics<parallel>], iteration_bounds = array<i64: 1>, scalar_prefetch = 0 : i64, scratch_operands = 0 : i64, tpu.core_type = #tpu.core_type<tc>, window_params = [{transform_indices = @transform_0, window_bounds = array<i64: 16, 128>}, {transform_indices = @transform_1, window_bounds = array<i64: 16, 128>}, {transform_indices = @transform_2, window_bounds = array<i64: 8, 128>}]} {
    %c0 = arith.constant 0 : index
    %c0_0 = arith.constant 0 : index
    %0 = vector.load %arg1[%c0, %c0_0] : memref<16x128xf32, #tpu.memory_space<vmem>>, vector<16x128xf32>
    %c0_1 = arith.constant 0 : index
    %c0_2 = arith.constant 0 : index
    %1 = vector.load %arg2[%c0_1, %c0_2] : memref<16x128xf32, #tpu.memory_space<vmem>>, vector<16x128xf32>
    %cst = arith.constant 9.99999993E-9 : f32
    %2 = vector.broadcast %cst : f32 to vector<16x128xf32>
    %3 = arith.addf %1, %2 : vector<16x128xf32>
    %cst_3 = arith.constant 9.99999993E-9 : f32
    %4 = vector.broadcast %cst_3 : f32 to vector<16x128xf32>
    %5 = arith.addf %0, %4 : vector<16x128xf32>
    %6 = arith.divf %3, %5 : vector<16x128xf32>
    %7 = math.log %6 : vector<16x128xf32>
    %8 = arith.mulf %1, %7 : vector<16x128xf32>
    %9 = vector.shape_cast %8 : vector<16x128xf32> to vector<2x8x128xf32>
    %cst_4 = arith.constant dense<0.000000e+00> : vector<8x128xf32>
    %10 = vector.multi_reduction <add>, %9, %cst_4 [0] : vector<2x8x128xf32> to vector<8x128xf32>
    %c0_5 = arith.constant 0 : index
    %c0_6 = arith.constant 0 : index
    %11 = vector.load %arg3[%c0_5, %c0_6] : memref<8x128xf32, #tpu.memory_space<vmem>>, vector<8x128xf32>
    tpu.vector_store %arg3[%c0_5, %c0_6], %10 {strides = array<i32>} : memref<8x128xf32, #tpu.memory_space<vmem>>, vector<8x128xf32>,
    return
  }
  func.func @transform_0(%arg0: i32) -> (i32, i32) {
    %c0_i32 = arith.constant 0 : i32
    %c0_i32_0 = arith.constant 0 : i32
    return %arg0, %c0_i32 : i32, i32
  }
  func.func @transform_1(%arg0: i32) -> (i32, i32) {
    %c0_i32 = arith.constant 0 : i32
    %c0_i32_0 = arith.constant 0 : i32
    return %arg0, %c0_i32 : i32, i32
  }
  func.func @transform_2(%arg0: i32) -> (i32, i32) {
    %c0_i32 = arith.constant 0 : i32
    %c0_i32_0 = arith.constant 0 : i32
    return %arg0, %c0_i32 : i32, i32
  }
}

</mosaic_0001>

<llo_original>
// kernel: tpu_custom_call.1
$region0: #{tpu_custom_call.1}
  #allocation0 [shape = 'u32[]', space=smem, size = 0x4, offset = 0x4, fixed_abs, tag = 'smem constant byte address 0x4 - core index']
  #allocation1 [shape = 'u32[144,128]{1,0:T(1,128)}', space=vmem, size = 0x12000, scoped, tag = 'internal scratch']
  %s0 = inlined_call_operand.hbm [shape: f32[16,128], index: 0, kind: input, shape index: {}]
  %s1 = inlined_call_operand.hbm [shape: f32[16,128], index: 1, kind: input, shape index: {}]
  %s2 = inlined_call_operand.hbm [shape: f32[8,128], index: 2, kind: output, shape index: {}]
  %s3 = sld [smem:[#allocation0]]
  $region26: #{tpu_custom_call.1} parent=0
    _
  %s5 = ssub.s32 1, %s3
  %s6 = scalar_select 0, %s5, %s3
  $region1: #{tpu_custom_call.1} parent=0
    #allocation2 [shape = 'u8[8192]{0}', space=vmem, size = 0x2000, scoped, tag = 'input window, operand 0, single buffered']
    #allocation3 [shape = 's32[1]{0}', space=sflag, size = 0x4, scoped, tag = 'scoped memory for tpu_custom_call.1']
    #allocation4 [shape = 's32[1]{0}', space=sflag, size = 0x4, scoped, tag = 'scoped memory for tpu_custom_call.1']
    #allocation5 [shape = 'u8[8192]{0}', space=vmem, size = 0x2000, scoped, tag = 'input window, operand 1, single buffered']
    #allocation6 [shape = 's32[1]{0}', space=sflag, size = 0x4, scoped, tag = 'scoped memory for tpu_custom_call.1']
    #allocation7 [shape = 'u8[4096]{0}', space=vmem, size = 0x1000, scoped, tag = 'output window, operand 0, single buffered']
    %7 = vsyncpa [#allocation3], 0
    %8 = vsyncpa [#allocation6], 0
    %9 = vsyncpa [#allocation4], 0
    // Predicated region
    $region2: #{tpu_custom_call.1} parent=1 // pred_check
      _
    $region3: #{tpu_custom_call.1} parent=1 // pred_check_branch
      %11 = sbr.rel (0) target = $region5
    $region4: #{tpu_custom_call.1} parent=1 // pred_region
      %s13 = ssub.s32 256, 256
      %14 = vsyncadd [#allocation3], %s13
      %s15 = sshll.u32 [#allocation2], 4
      %s16 = int_to_ptr.vmem [resolvable:$true] %s15
      %21 = dma.hbm_to_vmem [thread:$0]  %s0, 256, %s16, [#allocation3], 128, 128, 8
    $region5: #{tpu_custom_call.1} parent=1 // pred_fallthru
      _
    // Predicated region
    $region6: #{tpu_custom_call.1} parent=1 // pred_check
      _
    $region7: #{tpu_custom_call.1} parent=1 // pred_check_branch
      %23 = sbr.rel (0) target = $region9
    $region8: #{tpu_custom_call.1} parent=1 // pred_region
      %s25 = ssub.s32 256, 256
      %26 = vsyncadd [#allocation6], %s25
      %s27 = sshll.u32 [#allocation5], 4
      %s28 = int_to_ptr.vmem [resolvable:$true] %s27
      %33 = dma.hbm_to_vmem [thread:$0]  %s1, 256, %s28, [#allocation6], 128, 128, 8
    $region9: #{tpu_custom_call.1} parent=1 // pred_fallthru
      _
    // Predicated region
    $region10: #{tpu_custom_call.1} parent=1 // pred_check
      _
    $region11: #{tpu_custom_call.1} parent=1 // pred_check_branch
      %35 = sbr.rel (0) target = $region13
    $region12: #{tpu_custom_call.1} parent=1 // pred_region
      %36 = dma.done [#allocation3], 256
    $region13: #{tpu_custom_call.1} parent=1 // pred_fallthru
      _
    // Predicated region
    $region14: #{tpu_custom_call.1} parent=1 // pred_check
      _
    $region15: #{tpu_custom_call.1} parent=1 // pred_check_branch
      %38 = sbr.rel (0) target = $region17
    $region16: #{tpu_custom_call.1} parent=1 // pred_region
      %39 = dma.done [#allocation6], 256
    $region17: #{tpu_custom_call.1} parent=1 // pred_fallthru
      _
    %v40 = vld [vmem:[#allocation2] sm:$0xff]
    %v41 = vld [vmem:[#allocation2 + $0x8] sm:$0xff]
    %v42 = vld [vmem:[#allocation5] sm:$0xff]
    %v43 = vld [vmem:[#allocation5 + $0x8] sm:$0xff]
    %v44 = vadd.f32 %v42, 1e-08
    %v45 = vadd.f32 %v43, 1e-08
    %v46 = vadd.f32 %v40, 1e-08
    %v47 = vadd.f32 %v41, 1e-08
    %v48 = vrcp.pop %v46
    %v49 = vmul.f32 %v44, %v48
    %v50 = vrcp.pop %v47
    %v51 = vmul.f32 %v45, %v50
    %v52 = vlog2.pop %v49
    %v53 = vmul.f32 %v52, 0.6931472
    %v54 = vlog2.pop %v51
    %v55 = vmul.f32 %v54, 0.6931472
    %v56 = vmul.f32 %v42, %v53
    %v57 = vmul.f32 %v43, %v55
    %v58 = vadd.f32 %v56, %v57
    %59 = vst [vmem:[#allocation7] sm:$0xff] %v58
    // Predicated region
    $region18: #{tpu_custom_call.1} parent=1 // pred_check
      _
    $region19: #{tpu_custom_call.1} parent=1 // pred_check_branch
      %61 = sbr.rel (0) target = $region21
    $region20: #{tpu_custom_call.1} parent=1 // pred_region
      %s63 = ssub.s32 128, 128
      %64 = vsyncadd [#allocation4], %s63
      %s66 = sshll.u32 [#allocation7], 4
      %s67 = int_to_ptr.vmem [resolvable:$true] %s66
      %69 = dma.vmem_to_hbm [thread:$0]  %s67, 128, %s2, [#allocation4]
    $region21: #{tpu_custom_call.1} parent=1 // pred_fallthru
      _
    // Predicated region
    $region22: #{tpu_custom_call.1} parent=1 // pred_check
      _
    $region23: #{tpu_custom_call.1} parent=1 // pred_check_branch
      %71 = sbr.rel (0) target = $region25
    $region24: #{tpu_custom_call.1} parent=1 // pred_region
      %72 = dma.done [#allocation4], 128
    $region25: #{tpu_custom_call.1} parent=1 // pred_fallthru
      _
    %73 = vsyncpa [#allocation3], 1
    %74 = vsyncpa [#allocation6], 1
    %75 = vsyncpa [#allocation4], 1

</llo_original>
